<compile_context>
chip_gen: v7x
topology: tpu7x:2x2x1
jax: 0.10.0
libtpu: 0.0.40
codegen_flags: <defaults>
</compile_context>

<pallas_src>
import jax
import jax.numpy as jnp
from jax.experimental import pallas as pl
from jax.experimental.pallas import tpu as pltpu

_LANES = 128                    # vreg lane width
_SUBLANES = 8                   # f32 sublane count
_GRANULE = _LANES * _SUBLANES   # 1024 elements = one (8,128) f32 tile
_MAX_TILE_ROWS = 4096           # 2 MiB/buffer; 4 buffers (in+out, double-
                                # buffered) = 8 MiB < v5e 16 MiB scoped default


def linear_kernel(x_ref, wb_ref, o_ref):
    # x_ref / o_ref: (tile_rows, 128) lane-dense VMEM tiles of the flat batch.
    # wb_ref: (1, 2) SMEM scalars packed as [weight, bias], read once.
    w = wb_ref[0, 0]
    b = wb_ref[0, 1]
    o_ref[...] = x_ref[...] * w + b


def _xla_linear(x, w, b):
    # Trivial fused FMA; XLA runs this at HBM roofline with zero extra copies.
    return x * w + b


def linear_forward(x, weight, bias, *, block_rows=_MAX_TILE_ROWS,
                   pallas_min_batch=32768):
    """y = x @ W^T + b for nn.Linear(1, 1).

    x: (B, 1) f32, weight: (1, 1) f32, bias: (1,) f32 -> (B, 1) f32.
    Works for arbitrary B; large batches stream through the Pallas kernel in
    lane-dense (rows, 128) tiles, small batches and the misaligned tail use a
    fused XLA FMA.
    """
    B, F = x.shape
    assert F == 1 and weight.shape == (1, 1) and bias.shape == (1,)

    w = weight.reshape(()).astype(jnp.float32)
    b = bias.reshape(()).astype(jnp.float32)

    # --- small/medium batches: skip the kernel entirely (review item) -------
    if B < max(pallas_min_batch, _GRANULE):
        return _xla_linear(x.astype(jnp.float32), w, b)

    x_flat = x.reshape(-1).astype(jnp.float32)   # contiguous -> free reshape

    # --- tile sizing (no padding, no over-allocation) ------------------------
    # 8-aligned number of full 128-lane rows available in the batch.
    rows_avail = (B // _GRANULE) * _SUBLANES

    # Multiple of 8 (BlockSpec (8,128) rule) and VMEM-safe on all generations.
    tile_rows = min(block_rows, rows_avail, _MAX_TILE_ROWS)
    tile_rows = max(_SUBLANES, (tile_rows // _SUBLANES) * _SUBLANES)
    # Force >= 2 grid steps so the "parallel" axis shards across v7x's 2 TCs.
    if rows_avail // tile_rows < 2 and rows_avail >= 2 * _SUBLANES:
        tile_rows = max(_SUBLANES, ((rows_avail // 2) // _SUBLANES) * _SUBLANES)

    grid = rows_avail // tile_rows          # whole tiles only
    bulk_rows = grid * tile_rows
    bulk = bulk_rows * _LANES               # elements handled by the kernel

    # Bulk slab: when B is tile-aligned this is a pure (free) reshape of x.
    x_bulk = (x_flat if bulk == B else x_flat[:bulk]).reshape(bulk_rows, _LANES)

    # Pack weight + bias into a single (1, 2) SMEM operand.
    wb = jnp.stack([w, b]).reshape(1, 2)

    y_bulk = pl.pallas_call(
        linear_kernel,
        out_shape=jax.ShapeDtypeStruct((bulk_rows, _LANES), jnp.float32),
        grid=(grid,),
        in_specs=[
            # Lane-dense batch tile in VMEM (2 MiB at the default tile size).
            pl.BlockSpec((tile_rows, _LANES), lambda i: (i, 0)),
            # Packed scalars [w, b] in SMEM, whole array.
            pl.BlockSpec(memory_space=pltpu.MemorySpace.SMEM),
        ],
        out_specs=pl.BlockSpec((tile_rows, _LANES), lambda i: (i, 0)),
        # Write results in place over the input slab (same shape/dtype).
        input_output_aliases={0: 0},
        compiler_params=pltpu.CompilerParams(
            dimension_semantics=("parallel",),
        ),
    )(x_bulk, wb)

    y = y_bulk.reshape(-1)
    if bulk == B:
        return y.reshape(B, 1)

    # Misaligned remainder (< tile_rows*128 elements): fused XLA FMA, then one
    # concat to restore the (B, 1) nn.Linear output layout.
    y_tail = _xla_linear(x_flat[bulk:], w, b)
    return jnp.concatenate([y, y_tail]).reshape(B, 1)


if __name__ == "__main__":
    # Deterministic parameter init (synthetic; mimics nn.Linear(1, 1) shapes).
    key = jax.random.PRNGKey(0)
    kx, kw, kb = jax.random.split(key, 3)

    # PyTorch default init is U(-1/sqrt(fan_in), 1/sqrt(fan_in)) = U(-1, 1)
    weight = jax.random.uniform(kw, (1, 1), minval=-1.0, maxval=1.0,
                                dtype=jnp.float32)
    bias = jax.random.uniform(kb, (1,), minval=-1.0, maxval=1.0,
                              dtype=jnp.float32)

    # 1) Small batch (the module's natural regime): fused XLA fast path.
    B = 16
    x = jax.random.normal(kx, (B, 1), dtype=jnp.float32)
    y = jax.block_until_ready(linear_forward(x, weight, bias))
    y_ref = x @ weight.T + bias
    assert y.shape == (B, 1)
    assert jnp.allclose(y, y_ref, atol=1e-6), "mismatch vs reference (B=16)"

    # 2) Forced Pallas path with tiny tiles: multi-tile grid + XLA tail,
    #    misaligned batch size (exercises bulk/tail split, no padding).
    B2 = 5000
    x2 = jax.random.normal(jax.random.PRNGKey(1), (B2, 1), dtype=jnp.float32)
    y2 = jax.block_until_ready(
        linear_forward(x2, weight, bias, block_rows=8, pallas_min_batch=0))
    y2_ref = x2 @ weight.T + bias
    assert y2.shape == (B2, 1)
    assert jnp.allclose(y2, y2_ref, atol=1e-6), "mismatch vs reference (B=5000)"

    # 3) Default Pallas path: >= 2 grid steps (v7x megacore) + XLA tail.
    B3 = 50_000
    x3 = jax.random.normal(jax.random.PRNGKey(2), (B3, 1), dtype=jnp.float32)
    y3 = jax.block_until_ready(linear_forward(x3, weight, bias))
    y3_ref = x3 @ weight.T + bias
    assert y3.shape == (B3, 1)
    assert jnp.allclose(y3, y3_ref, atol=1e-6), "mismatch vs reference (B=50000)"

    print("KERNEL_OK")
</pallas_src>

<mosaic_0001>
module attributes {stable_mosaic.version = 11 : i64} {
  func.func @linear_kernel(%arg0: i32, %arg1: memref<8x128xf32, #tpu.memory_space<vmem>>, %arg2: memref<1x2xf32, #tpu.memory_space<smem>>, %arg3: memref<8x128xf32, #tpu.memory_space<vmem>>) attributes {dimension_semantics = [#tpu.dimension_semantics<parallel>], iteration_bounds = array<i64: 4>, scalar_prefetch = 0 : i64, scratch_operands = 0 : i64, tpu.core_type = #tpu.core_type<tc>, window_params = [{transform_indices = @transform_0, window_bounds = array<i64: 8, 128>}, {transform_indices = @transform_1, window_bounds = array<i64: 1, 2>}, {transform_indices = @transform_2, window_bounds = array<i64: 8, 128>}]} {
    %c0 = arith.constant 0 : index
    %c0_0 = arith.constant 0 : index
    %0 = memref.load %arg2[%c0, %c0_0] : memref<1x2xf32, #tpu.memory_space<smem>>
    %c0_1 = arith.constant 0 : index
    %c1 = arith.constant 1 : index
    %1 = memref.load %arg2[%c0_1, %c1] : memref<1x2xf32, #tpu.memory_space<smem>>
    %c0_2 = arith.constant 0 : index
    %c0_3 = arith.constant 0 : index
    %2 = vector.load %arg1[%c0_2, %c0_3] : memref<8x128xf32, #tpu.memory_space<vmem>>, vector<8x128xf32>
    %3 = vector.broadcast %0 : f32 to vector<8x128xf32>
    %4 = arith.mulf %2, %3 : vector<8x128xf32>
    %5 = vector.broadcast %1 : f32 to vector<8x128xf32>
    %6 = arith.addf %4, %5 : vector<8x128xf32>
    %c0_4 = arith.constant 0 : index
    %c0_5 = arith.constant 0 : index
    %7 = vector.load %arg3[%c0_4, %c0_5] : memref<8x128xf32, #tpu.memory_space<vmem>>, vector<8x128xf32>
    tpu.vector_store %arg3[%c0_4, %c0_5], %6 {strides = array<i32>} : memref<8x128xf32, #tpu.memory_space<vmem>>, vector<8x128xf32>,
    return
  }
  func.func @transform_0(%arg0: i32) -> (i32, i32) {
    %c0_i32 = arith.constant 0 : i32
    %c0_i32_0 = arith.constant 0 : i32
    return %arg0, %c0_i32 : i32, i32
  }
  func.func @transform_1(%arg0: i32) -> (i32, i32) {
    %c0_i32 = arith.constant 0 : i32
    %c0_i32_0 = arith.constant 0 : i32
    %c0_i32_1 = arith.constant 0 : i32
    return %c0_i32, %c0_i32_0 : i32, i32
  }
  func.func @transform_2(%arg0: i32) -> (i32, i32) {
    %c0_i32 = arith.constant 0 : i32
    %c0_i32_0 = arith.constant 0 : i32
    return %arg0, %c0_i32 : i32, i32
  }
}

</mosaic_0001>

<llo_original>
// kernel: tpu_custom_call.1
$region0: #{tpu_custom_call.1}
  #allocation0 [shape = 'u32[]', space=smem, size = 0x4, offset = 0x4, fixed_abs, tag = 'smem constant byte address 0x4 - core index']
  #allocation1 [shape = 'u32[144,128]{1,0:T(1,128)}', space=vmem, size = 0x12000, scoped, tag = 'internal scratch']
  %s0 = inlined_call_operand.hbm [shape: f32[32,128], index: 0, kind: input, shape index: {}, may-alias: {0,2}]
  %s1 = inlined_call_operand.vmem [shape: f32[1,2], index: 1, kind: input, shape index: {}]
  %s2 = inlined_call_operand.hbm [shape: f32[32,128], index: 2, kind: output, shape index: {}, may-alias: {0,2}]
  %s3 = sld [smem:[#allocation0]]
  $region49: #{tpu_custom_call.1} parent=0
    _
  %s5 = ssub.s32 1, %s3
  %s6 = scalar_select 0, %s5, %s3
  $region1: #{tpu_custom_call.1} parent=0
    #allocation2 [shape = 'u8[8192]{0}', space=vmem, size = 0x2000, scoped, tag = 'input window, operand 0']
    #allocation3 [shape = 's32[2]{0}', space=sflag, size = 0x8, scoped, tag = 'scoped memory for tpu_custom_call.1']
    #allocation4 [shape = 's32[2]{0}', space=sflag, size = 0x8, scoped, tag = 'scoped memory for tpu_custom_call.1']
    #allocation5 [shape = 's32[2]{0}', space=sflag, size = 0x8, scoped, tag = 'scoped memory for tpu_custom_call.1']
    #allocation6 [shape = 'u8[512]{0}', space=smem, size = 0x200, scoped, tag = 'input window, operand 1, single buffered']
    #allocation7 [shape = 'u8[8192]{0}', space=vmem, size = 0x2000, scoped, tag = 'output window, operand 0']
    %7 = vsyncpa [#allocation3], 0
    %s8 = scalar_lea.sflag [#allocation3], 1
    %9 = vsyncpa %s8, 0
    %10 = vsyncpa [#allocation5], 0
    %11 = vsyncpa [#allocation4], 0
    %s12 = scalar_lea.sflag [#allocation4], 1
    %13 = vsyncpa %s12, 0
    loop: start=0, step=1, limit=6
    $region2: #{tpu_custom_call.1} parent=1 // loop_pre_header
      _
    $region3: #{tpu_custom_call.1} parent=1 // loop_header
      %s15 = sphi 0, %s19
      %p16 = scmp.ge.s32.totalorder %s15, 6
      %s25 = sphi 0, %s27
      %s28 = sphi 0, %s25
      %s29 = sphi 0, %s28
      %s45 = sphi 0, %s29
      %s49 = sphi 0, %s49
      %s51 = sphi 0, %s49
      %s52 = sphi 0, %s51
      %s66 = sphi 0, %s52
      %s72 = sphi 0, %s74
      %s75 = sphi 0, %s72
      %s76 = sphi 0, %s75
      %s92 = sphi 0, %s76
    $region4: #{tpu_custom_call.1} parent=1 // loop_header_branch
      %18 = sbr.rel (%p16) target = $region8
    $region5: #{tpu_custom_call.1} parent=1 // loop_body
      %s20 = ssub.s32 %s15, 1
      %s21 = ssub.s32 %s15, 2
      %s22 = sadd.s32 %s15, 1
      %s23 = ssub.s32 %s15, %s22
      %p24 = scmp.eq.s32.totalorder %s23, 0
      %s26 = sadd.s32 %s25, 1
      %s27 = scalar_select %p24, %s25, %s26
      %p30 = pneg %p24
      %p31 = scmp.eq.s32.totalorder %s15, 3
      %p32 = por %p30, %p31
      %p33 = scmp.ne.s32.totalorder %s25, %s28
      %p34 = scmp.eq.s32.totalorder %s15, 0
      %p35 = por %p33, %p34
      %p36 = scmp.ne.s32.totalorder %s25, %s28
      %p37 = scmp.eq.s32.totalorder %s20, 3
      %p38 = por %p36, %p37
      %p39 = scmp.ne.s32.totalorder %s28, %s29
      %p40 = scmp.eq.s32.totalorder %s20, 0
      %p41 = por %p39, %p40
      %p42 = scmp.ne.s32.totalorder %s28, %s29
      %p43 = scmp.eq.s32.totalorder %s21, 3
      %p44 = por %p42, %p43
      %p46 = scmp.ne.s32.totalorder %s29, %s45
      %p47 = scmp.eq.s32.totalorder %s21, 0
      %p48 = por %p46, %p47
      %s50 = sadd.s32 %s49, 1
      %p53 = scmp.eq.s32.totalorder %s15, 3
      %p54 = scmp.ne.s32.totalorder %s49, %s51
      %p55 = scmp.eq.s32.totalorder %s15, 0
      %p56 = por %p54, %p55
      %p57 = scmp.ne.s32.totalorder %s49, %s51
      %p58 = scmp.eq.s32.totalorder %s20, 3
      %p59 = por %p57, %p58
      %p60 = scmp.ne.s32.totalorder %s51, %s52
      %p61 = scmp.eq.s32.totalorder %s20, 0
      %p62 = por %p60, %p61
      %p63 = scmp.ne.s32.totalorder %s51, %s52
      %p64 = scmp.eq.s32.totalorder %s21, 3
      %p65 = por %p63, %p64
      %p67 = scmp.ne.s32.totalorder %s52, %s66
      %p68 = scmp.eq.s32.totalorder %s21, 0
      %p69 = por %p67, %p68
      %s70 = ssub.s32 %s15, %s22
      %p71 = scmp.eq.s32.totalorder %s70, 0
      %s73 = sadd.s32 %s72, 1
      %s74 = scalar_select %p71, %s72, %s73
      %p77 = pneg %p71
      %p78 = scmp.eq.s32.totalorder %s15, 3
      %p79 = por %p77, %p78
      %p80 = scmp.ne.s32.totalorder %s72, %s75
      %p81 = scmp.eq.s32.totalorder %s15, 0
      %p82 = por %p80, %p81
      %p83 = scmp.ne.s32.totalorder %s72, %s75
      %p84 = scmp.eq.s32.totalorder %s20, 3
      %p85 = por %p83, %p84
      %p86 = scmp.ne.s32.totalorder %s75, %s76
      %p87 = scmp.eq.s32.totalorder %s20, 0
      %p88 = por %p86, %p87
      %p89 = scmp.ne.s32.totalorder %s75, %s76
      %p90 = scmp.eq.s32.totalorder %s21, 3
      %p91 = por %p89, %p90
      %p93 = scmp.ne.s32.totalorder %s76, %s92
      %p94 = scmp.eq.s32.totalorder %s21, 0
      %p95 = por %p93, %p94
      %p96 = scmp.le.s32.totalorder 1, %s15
      %p97 = scmp.lt.s32.totalorder %s15, 5
      %p98 = pnand %p96, %p97
      %p99 = pneg %p98
      // Predicated region
      $region9: #{tpu_custom_call.1} parent=5 // pred_check
        _
      $region10: #{tpu_custom_call.1} parent=5 // pred_check_branch
        %101 = sbr.rel (%p98) target = $region12
      $region11: #{tpu_custom_call.1} parent=5 // pred_region
        %s102 = ssub.s32 %s15, 1
        // Predicated region
        $region13: #{tpu_custom_call.1} parent=11 // pred_check
          %p103 = pneg %p62
        $region14: #{tpu_custom_call.1} parent=11 // pred_check_branch
          %105 = sbr.rel (%p103) target = $region16
        $region15: #{tpu_custom_call.1} parent=11 // pred_region
          %s107 = ssub.s32 16, 16
          %108 = vsyncadd [#allocation5], %s107
          %s110 = sshll.u32 %s1, 4
          %s111 = int_to_ptr.vmem [resolvable:$true] %s110
          %113 = dma.vmem_to_smem %s111, 16, [#allocation6], [#allocation5]
        $region16: #{tpu_custom_call.1} parent=11 // pred_fallthru
          _
      $region12: #{tpu_custom_call.1} parent=5 // pred_fallthru
        _
      %p114 = scmp.lt.s32.totalorder %s15, 4
      // Predicated region
      $region17: #{tpu_custom_call.1} parent=5 // pred_check
        %p115 = pneg %p114
      $region18: #{tpu_custom_call.1} parent=5 // pred_check_branch
        %117 = sbr.rel (%p115) target = $region20
      $region19: #{tpu_custom_call.1} parent=5 // pred_region
        // Predicated region
        $region21: #{tpu_custom_call.1} parent=19 // pred_check
          %p118 = pneg %p35
        $region22: #{tpu_custom_call.1} parent=19 // pred_check_branch
          %120 = sbr.rel (%p118) target = $region24
        $region23: #{tpu_custom_call.1} parent=19 // pred_region
          %s121 = sand.u32 %s25, 1
          %s122 = scalar_lea.sflag [#allocation3], %s121
          %s123 = sand.u32 %s25, 1
          %s124 = smul.addr %s123, 8
          %s125 = scalar_lea.vmem [#allocation2], %s124
          %s127 = ssub.s32 128, 128
          %128 = vsyncadd %s122, %s127
          %s129 = smul.addr %s15, 128
          %s130 = scalar_lea.hbm %s0, %s129
          %s132 = sshll.u32 %s125, 4
          %s133 = int_to_ptr.vmem [resolvable:$true] %s132
          %135 = dma.hbm_to_vmem [thread:$0]  %s130, 128, %s133, %s122
        $region24: #{tpu_custom_call.1} parent=19 // pred_fallthru
          _
      $region20: #{tpu_custom_call.1} parent=5 // pred_fallthru
        _
      %p136 = scmp.le.s32.totalorder 1, %s15
      %p137 = scmp.lt.s32.totalorder %s15, 5
      %p138 = pnand %p136, %p137
      %p139 = pneg %p138
      // Predicated region
      $region25: #{tpu_custom_call.1} parent=5 // pred_check
        _
      $region26: #{tpu_custom_call.1} parent=5 // pred_check_branch
        %141 = sbr.rel (%p138) target = $region28
      $region27: #{tpu_custom_call.1} parent=5 // pred_region
        %s142 = ssub.s32 %s15, 1
        %s143 = sand.u32 %s28, 1
        %s144 = scalar_lea.sflag [#allocation3], %s143
        %s145 = sand.u32 %s28, 1
        %s146 = smul.addr %s145, 8
        %s147 = scalar_lea.vmem [#allocation2], %s146
        // Predicated region
        $region29: #{tpu_custom_call.1} parent=27 // pred_check
          %p148 = pneg %p41
        $region30: #{tpu_custom_call.1} parent=27 // pred_check_branch
          %150 = sbr.rel (%p148) target = $region32
        $region31: #{tpu_custom_call.1} parent=27 // pred_region
          %151 = dma.done %s144, 128
        $region32: #{tpu_custom_call.1} parent=27 // pred_fallthru
          _
        // Predicated region
        $region33: #{tpu_custom_call.1} parent=27 // pred_check
          %p152 = pneg %p62
        $region34: #{tpu_custom_call.1} parent=27 // pred_check_branch
          %154 = sbr.rel (%p152) target = $region36
        $region35: #{tpu_custom_call.1} parent=27 // pred_region
          %155 = dma.done [#allocation5], 16
        $region36: #{tpu_custom_call.1} parent=27 // pred_fallthru
          _
        %156 = sfence
        %s157 = sand.u32 %s28, 1
        %s158 = scalar_lea.sflag [#allocation3], %s157
        %s159 = sand.u32 %s28, 1
        %s160 = smul.addr %s159, 8
        %s161 = scalar_lea.vmem [#allocation2], %s160
        %p162 = pneg %p41
        %p163 = pneg %p38
        %p164 = pneg %p62
        %p165 = pneg %p59
        %p166 = pneg %p88
        %p167 = pneg %p85
        %s168 = sand.u32 %s75, 1
        %s169 = scalar_lea.sflag [#allocation4], %s168
        %s170 = sand.u32 %s75, 1
        %s171 = smul.addr %s170, 8
        %s172 = scalar_lea.vmem [#allocation7], %s171
        %s173 = sld [smem:[#allocation6]]
        %s174 = sld [smem:[#allocation6 + $0x1]]
        %v175 = vld [vmem:[%s147] sm:$0xff]
        %v176 = vstv %s173
        %v177 = vmul.f32 %v175, %v176
        %v178 = vstv %s174
        %v179 = vadd.f32 %v177, %v178
        %180 = vst [vmem:[%s172] sm:$0xff] %v179
        %s181 = sand.u32 %s75, 1
        %s182 = scalar_lea.sflag [#allocation4], %s181
        %s183 = sand.u32 %s75, 1
        %s184 = smul.addr %s183, 8
        %s185 = scalar_lea.vmem [#allocation7], %s184
        // Predicated region
        $region37: #{tpu_custom_call.1} parent=27 // pred_check
          %p186 = pneg %p85
        $region38: #{tpu_custom_call.1} parent=27 // pred_check_branch
          %188 = sbr.rel (%p186) target = $region40
        $region39: #{tpu_custom_call.1} parent=27 // pred_region
          %s190 = ssub.s32 128, 128
          %191 = vsyncadd %s182, %s190
          %s192 = smul.addr %s20, 128
          %s193 = scalar_lea.hbm %s2, %s192
          %s195 = sshll.u32 %s185, 4
          %s196 = int_to_ptr.vmem [resolvable:$true] %s195
          %198 = dma.vmem_to_hbm [thread:$0]  %s196, 128, %s193, %s182
        $region40: #{tpu_custom_call.1} parent=27 // pred_fallthru
          _
      $region28: #{tpu_custom_call.1} parent=5 // pred_fallthru
        _
      %p199 = scmp.le.s32.totalorder 2, %s15
      // Predicated region
      $region41: #{tpu_custom_call.1} parent=5 // pred_check
        %p200 = pneg %p199
      $region42: #{tpu_custom_call.1} parent=5 // pred_check_branch
        %202 = sbr.rel (%p200) target = $region44
      $region43: #{tpu_custom_call.1} parent=5 // pred_region
        %s203 = ssub.s32 %s15, 2
        // Predicated region
        $region45: #{tpu_custom_call.1} parent=43 // pred_check
          %p204 = pneg %p91
        $region46: #{tpu_custom_call.1} parent=43 // pred_check_branch
          %206 = sbr.rel (%p204) target = $region48
        $region47: #{tpu_custom_call.1} parent=43 // pred_region
          %s207 = sand.u32 %s76, 1
          %s208 = scalar_lea.sflag [#allocation4], %s207
          %s209 = sand.u32 %s76, 1
          %s210 = smul.addr %s209, 8
          %s211 = scalar_lea.vmem [#allocation7], %s210
          %212 = dma.done %s208, 128
        $region48: #{tpu_custom_call.1} parent=43 // pred_fallthru
          _
      $region44: #{tpu_custom_call.1} parent=5 // pred_fallthru
        _
    $region6: #{tpu_custom_call.1} parent=1 // loop_footer
      %s19 = sadd.s32 1, %s15
    $region7: #{tpu_custom_call.1} parent=1 // loop_footer_branch
      %14 = sbr.rel target = $region3
    $region8: #{tpu_custom_call.1} parent=1 // loop_exit
      _
    %213 = vsyncpa [#allocation3], 1
    %s214 = scalar_lea.sflag [#allocation3], 1
    %215 = vsyncpa %s214, 1
    %216 = vsyncpa [#allocation4], 1
    %s217 = scalar_lea.sflag [#allocation4], 1
    %218 = vsyncpa %s217, 1
    %219 = vsyncpa [#allocation5], 1
    %s220 = scalar_lea.sflag [#allocation5], 1
    %221 = vsyncpa %s220, 1

</llo_original>
